<compile_context>
chip_gen: v7x
topology: tpu7x:2x2x1
jax: 0.10.0
libtpu: 0.0.40
codegen_flags: <defaults>
</compile_context>

<pallas_src>
import functools

import numpy as np
import jax
import jax.numpy as jnp
from jax.experimental import pallas as pl
from jax.experimental.pallas import tpu as pltpu


# ----------------------------------------------------------------------------
# Fused depthwise(KxK)+BN+ReLU -> pointwise(1x1)+BN+ReLU kernel.
# Single invocation: whole (N*Cin, Mp) problem is VMEM-resident.
# ----------------------------------------------------------------------------
def _ds_conv_kernel(x_ref, wdwm_ref, bdw_ref, wpw_ref, bpw_ref, o_ref,
                    *, K, W, Mp, pad):
    # x_ref:    (N*Cin, Mp)        input, batch folded into sublanes, flat spatial
    # wdwm_ref: (K*K, N*Cin, Mp)   depthwise weights, BN scale + validity mask folded
    # bdw_ref:  (N*Cin, 1)         depthwise folded bias
    # wpw_ref:  (N*Cout, N*Cin)    block-diagonal pointwise weight, BN scale folded
    # bpw_ref:  (N*Cout, 1)        pointwise folded bias
    # o_ref:    (N*Cout, Mp)       output (lane-dense store)
    x = x_ref[...]                                      # (NC, Mp) f32

    # ---- depthwise KxK conv: 9 static taps, each = lane-roll * masked weight ----
    acc = jnp.zeros(x.shape, jnp.float32)
    for kh in range(K):                                 # static unrolled taps
        for kw in range(K):
            off = (kh - pad) * W + (kw - pad)           # static flat-spatial offset
            win = x if off == 0 else pltpu.roll(x, (-off) % Mp, 1)
            acc = acc + win * wdwm_ref[kh * K + kw]     # one mul + one add per tap

    y = jnp.maximum(acc + bdw_ref[...], 0.0)            # (NC, Mp), stays in VMEM

    # ---- pointwise 1x1 conv on the MXU (block-diag over batch) + bias + ReLU ----
    z = jnp.dot(wpw_ref[...], y, preferred_element_type=jnp.float32)  # (NCo, Mp)
    z = jnp.maximum(z + bpw_ref[...], 0.0)
    o_ref[...] = z.astype(o_ref.dtype)                  # unmasked, lane-dense store


# ----------------------------------------------------------------------------
# Host-side wrapper (NCHW in / NCHW out, PyTorch layout).
# ----------------------------------------------------------------------------
def fold_bn(gamma, beta, mean, var, conv_bias, eps=1e-5):
    scale = gamma / jnp.sqrt(var + eps)
    bias = beta + scale * (conv_bias - mean)
    return scale.astype(jnp.float32), bias.astype(jnp.float32)


def depth_separable_conv2d(x_nchw, params, *, K=3, pad=1):
    """Forward of DepthSeperableConv2d (eval-mode BN)."""
    N, Cin, H, W = x_nchw.shape
    M = H * W
    Mp = ((M + 127) // 128) * 128          # lane-dense spatial length
    Cout = params["pw_weight"].shape[0]
    NC, NCo = N * Cin, N * Cout

    # Fold BN (running stats) into the conv weights / biases on the host.
    s1, b1 = fold_bn(params["bn1_gamma"], params["bn1_beta"],
                     params["bn1_mean"], params["bn1_var"], params["dw_bias"])
    s2, b2 = fold_bn(params["bn2_gamma"], params["bn2_beta"],
                     params["bn2_mean"], params["bn2_var"], params["pw_bias"])

    # Per-tap validity masks over the padded flat spatial axis (rows, cols, pad).
    m_idx = np.arange(Mp)
    hh, ww = m_idx // W, m_idx % W
    masks = []
    for kh in range(K):
        for kw in range(K):
            dh, dw = kh - pad, kw - pad
            valid = ((m_idx < M) & (hh + dh >= 0) & (hh + dh < H)
                     & (ww + dw >= 0) & (ww + dw < W))
            masks.append(valid.astype(np.float32))
    masks = jnp.asarray(np.stack(masks))                         # (K*K, Mp)

    # Depthwise weight: torch (Cin,1,K,K) -> per-tap (K*K, Cin), BN scale folded,
    # then validity mask folded in and tiled over the batch -> (K*K, N*Cin, Mp).
    w_dw = params["dw_weight"][:, 0, :, :].astype(jnp.float32) * s1[:, None, None]
    w_dw_taps = jnp.transpose(w_dw.reshape(Cin, K * K), (1, 0))   # (K*K, Cin)
    w_dw_masked = w_dw_taps[:, :, None] * masks[:, None, :]       # (K*K, Cin, Mp)
    w_dw_masked = jnp.tile(w_dw_masked, (1, N, 1))                # (K*K, NC, Mp)
    b_dw = jnp.tile(b1, (N,)).reshape(NC, 1)

    # Pointwise weight: torch (Cout,Cin,1,1) -> (Cout,Cin), BN scale folded,
    # expanded to a block-diagonal (N*Cout, N*Cin) so one MXU dot does the batch.
    w_pw = params["pw_weight"][:, :, 0, 0].astype(jnp.float32) * s2[:, None]
    w_pw_bd = jnp.kron(jnp.eye(N, dtype=jnp.float32), w_pw)       # (NCo, NC)
    b_pw = jnp.tile(b2, (N,)).reshape(NCo, 1)

    # Input: NCHW -> (N*Cin, M) is a free row-major reshape; pad lanes to Mp.
    x_flat = x_nchw.reshape(NC, M).astype(jnp.float32)
    if Mp != M:
        x_flat = jnp.pad(x_flat, ((0, 0), (0, Mp - M)))

    kernel = functools.partial(_ds_conv_kernel, K=K, W=W, Mp=Mp, pad=pad)
    z = pl.pallas_call(
        kernel,
        out_shape=jax.ShapeDtypeStruct((NCo, Mp), jnp.float32),
    )(x_flat, w_dw_masked, b_dw, w_pw_bd, b_pw)

    # (N*Cout, M) -> NCHW is a free reshape.
    return z[:, :M].reshape(N, Cout, H, W).astype(x_nchw.dtype)


# ----------------------------------------------------------------------------
# Pure-JAX reference (same math) for a sanity check.
# ----------------------------------------------------------------------------
def reference(x_nchw, params, *, K=3, pad=1):
    N, Cin, H, W = x_nchw.shape
    x = jnp.transpose(x_nchw, (0, 2, 3, 1))
    xp = jnp.pad(x, ((0, 0), (pad, pad), (pad, pad), (0, 0)))
    w_dw = jnp.transpose(params["dw_weight"][:, 0, :, :], (1, 2, 0))
    acc = jnp.zeros((N, H, W, Cin), jnp.float32)
    for kh in range(K):
        for kw in range(K):
            acc = acc + xp[:, kh:kh + H, kw:kw + W, :] * w_dw[kh, kw, :]
    s1, b1 = fold_bn(params["bn1_gamma"], params["bn1_beta"],
                     params["bn1_mean"], params["bn1_var"], params["dw_bias"])
    y = jnp.maximum(acc * s1 + b1, 0.0)
    w_pw = jnp.transpose(params["pw_weight"][:, :, 0, 0], (1, 0))
    s2, b2 = fold_bn(params["bn2_gamma"], params["bn2_beta"],
                     params["bn2_mean"], params["bn2_var"], params["pw_bias"])
    z = jnp.matmul(y, w_pw, precision=jax.lax.Precision.HIGHEST)
    z = jnp.maximum(z * s2 + b2, 0.0)
    return jnp.transpose(z, (0, 3, 1, 2))


if __name__ == "__main__":
    # Small shapes consistent with the module: batch=2, Cin=4, Cout=8, 16x16, K=3.
    N, Cin, Cout, H, W, K = 2, 4, 8, 16, 16, 3

    key = jax.random.PRNGKey(0)
    ks = jax.random.split(key, 8)
    params = {
        "dw_weight": 0.1 * jax.random.normal(ks[0], (Cin, 1, K, K), jnp.float32),
        "dw_bias":   0.1 * jax.random.normal(ks[1], (Cin,), jnp.float32),
        "pw_weight": 0.1 * jax.random.normal(ks[2], (Cout, Cin, 1, 1), jnp.float32),
        "pw_bias":   0.1 * jax.random.normal(ks[3], (Cout,), jnp.float32),
        # BN params (eval mode running stats)
        "bn1_gamma": 1.0 + 0.05 * jnp.arange(Cin, dtype=jnp.float32),
        "bn1_beta":  0.01 * jnp.arange(Cin, dtype=jnp.float32),
        "bn1_mean":  jnp.zeros((Cin,), jnp.float32),
        "bn1_var":   jnp.ones((Cin,), jnp.float32),
        "bn2_gamma": 1.0 + 0.05 * jnp.arange(Cout, dtype=jnp.float32),
        "bn2_beta":  0.01 * jnp.arange(Cout, dtype=jnp.float32),
        "bn2_mean":  jnp.zeros((Cout,), jnp.float32),
        "bn2_var":   jnp.ones((Cout,), jnp.float32),
    }

    x = jax.random.normal(ks[4], (N, Cin, H, W), jnp.float32)

    out = depth_separable_conv2d(x, params, K=K, pad=1)
    out = jax.block_until_ready(out)

    ref = reference(x, params, K=K, pad=1)
    assert out.shape == (N, Cout, H, W), out.shape
    assert jnp.max(jnp.abs(out - ref)) < 1e-3

    print("KERNEL_OK")
</pallas_src>

<mosaic_0001>
module attributes {stable_mosaic.version = 11 : i64} {
  func.func @_ds_conv_kernel(%arg0: memref<8x256xf32, #tpu.memory_space<vmem>>, %arg1: memref<9x8x256xf32, #tpu.memory_space<vmem>>, %arg2: memref<8x1xf32, #tpu.memory_space<vmem>>, %arg3: memref<16x8xf32, #tpu.memory_space<vmem>>, %arg4: memref<16x1xf32, #tpu.memory_space<vmem>>, %arg5: memref<16x256xf32, #tpu.memory_space<vmem>>) attributes {dimension_semantics = [], scalar_prefetch = 0 : i64, scratch_operands = 0 : i64, tpu.core_type = #tpu.core_type<tc>} {
    %c0 = arith.constant 0 : index
    %c0_0 = arith.constant 0 : index
    %0 = vector.load %arg0[%c0, %c0_0] : memref<8x256xf32, #tpu.memory_space<vmem>>, vector<8x256xf32>
    %cst = arith.constant 0.000000e+00 : f32
    %1 = vector.broadcast %cst : f32 to vector<8x256xf32>
    %c17_i32 = arith.constant 17 : i32
    %2 = tpu.dynamic_rotate %0 by %c17_i32 dim 1 : vector<8x256xf32>, i32 -> vector<8x256xf32>
    %c0_1 = arith.constant 0 : index
    %c0_2 = arith.constant 0 : index
    %c0_3 = arith.constant 0 : index
    %3 = vector.load %arg1[%c0_1, %c0_2, %c0_3] : memref<9x8x256xf32, #tpu.memory_space<vmem>>, vector<1x8x256xf32>
    %4 = vector.shape_cast %3 : vector<1x8x256xf32> to vector<8x256xf32>
    %5 = arith.mulf %2, %4 : vector<8x256xf32>
    %6 = arith.addf %1, %5 : vector<8x256xf32>
    %c16_i32 = arith.constant 16 : i32
    %7 = tpu.dynamic_rotate %0 by %c16_i32 dim 1 : vector<8x256xf32>, i32 -> vector<8x256xf32>
    %c1 = arith.constant 1 : index
    %c0_4 = arith.constant 0 : index
    %c0_5 = arith.constant 0 : index
    %8 = vector.load %arg1[%c1, %c0_4, %c0_5] : memref<9x8x256xf32, #tpu.memory_space<vmem>>, vector<1x8x256xf32>
    %9 = vector.shape_cast %8 : vector<1x8x256xf32> to vector<8x256xf32>
    %10 = arith.mulf %7, %9 : vector<8x256xf32>
    %11 = arith.addf %6, %10 : vector<8x256xf32>
    %c15_i32 = arith.constant 15 : i32
    %12 = tpu.dynamic_rotate %0 by %c15_i32 dim 1 : vector<8x256xf32>, i32 -> vector<8x256xf32>
    %c2 = arith.constant 2 : index
    %c0_6 = arith.constant 0 : index
    %c0_7 = arith.constant 0 : index
    %13 = vector.load %arg1[%c2, %c0_6, %c0_7] : memref<9x8x256xf32, #tpu.memory_space<vmem>>, vector<1x8x256xf32>
    %14 = vector.shape_cast %13 : vector<1x8x256xf32> to vector<8x256xf32>
    %15 = arith.mulf %12, %14 : vector<8x256xf32>
    %16 = arith.addf %11, %15 : vector<8x256xf32>
    %c1_i32 = arith.constant 1 : i32
    %17 = tpu.dynamic_rotate %0 by %c1_i32 dim 1 : vector<8x256xf32>, i32 -> vector<8x256xf32>
    %c3 = arith.constant 3 : index
    %c0_8 = arith.constant 0 : index
    %c0_9 = arith.constant 0 : index
    %18 = vector.load %arg1[%c3, %c0_8, %c0_9] : memref<9x8x256xf32, #tpu.memory_space<vmem>>, vector<1x8x256xf32>
    %19 = vector.shape_cast %18 : vector<1x8x256xf32> to vector<8x256xf32>
    %20 = arith.mulf %17, %19 : vector<8x256xf32>
    %21 = arith.addf %16, %20 : vector<8x256xf32>
    %c4 = arith.constant 4 : index
    %c0_10 = arith.constant 0 : index
    %c0_11 = arith.constant 0 : index
    %22 = vector.load %arg1[%c4, %c0_10, %c0_11] : memref<9x8x256xf32, #tpu.memory_space<vmem>>, vector<1x8x256xf32>
    %23 = vector.shape_cast %22 : vector<1x8x256xf32> to vector<8x256xf32>
    %24 = arith.mulf %0, %23 : vector<8x256xf32>
    %25 = arith.addf %21, %24 : vector<8x256xf32>
    %c255_i32 = arith.constant 255 : i32
    %26 = tpu.dynamic_rotate %0 by %c255_i32 dim 1 : vector<8x256xf32>, i32 -> vector<8x256xf32>
    %c5 = arith.constant 5 : index
    %c0_12 = arith.constant 0 : index
    %c0_13 = arith.constant 0 : index
    %27 = vector.load %arg1[%c5, %c0_12, %c0_13] : memref<9x8x256xf32, #tpu.memory_space<vmem>>, vector<1x8x256xf32>
    %28 = vector.shape_cast %27 : vector<1x8x256xf32> to vector<8x256xf32>
    %29 = arith.mulf %26, %28 : vector<8x256xf32>
    %30 = arith.addf %25, %29 : vector<8x256xf32>
    %c241_i32 = arith.constant 241 : i32
    %31 = tpu.dynamic_rotate %0 by %c241_i32 dim 1 : vector<8x256xf32>, i32 -> vector<8x256xf32>
    %c6 = arith.constant 6 : index
    %c0_14 = arith.constant 0 : index
    %c0_15 = arith.constant 0 : index
    %32 = vector.load %arg1[%c6, %c0_14, %c0_15] : memref<9x8x256xf32, #tpu.memory_space<vmem>>, vector<1x8x256xf32>
    %33 = vector.shape_cast %32 : vector<1x8x256xf32> to vector<8x256xf32>
    %34 = arith.mulf %31, %33 : vector<8x256xf32>
    %35 = arith.addf %30, %34 : vector<8x256xf32>
    %c240_i32 = arith.constant 240 : i32
    %36 = tpu.dynamic_rotate %0 by %c240_i32 dim 1 : vector<8x256xf32>, i32 -> vector<8x256xf32>
    %c7 = arith.constant 7 : index
    %c0_16 = arith.constant 0 : index
    %c0_17 = arith.constant 0 : index
    %37 = vector.load %arg1[%c7, %c0_16, %c0_17] : memref<9x8x256xf32, #tpu.memory_space<vmem>>, vector<1x8x256xf32>
    %38 = vector.shape_cast %37 : vector<1x8x256xf32> to vector<8x256xf32>
    %39 = arith.mulf %36, %38 : vector<8x256xf32>
    %40 = arith.addf %35, %39 : vector<8x256xf32>
    %c239_i32 = arith.constant 239 : i32
    %41 = tpu.dynamic_rotate %0 by %c239_i32 dim 1 : vector<8x256xf32>, i32 -> vector<8x256xf32>
    %c8 = arith.constant 8 : index
    %c0_18 = arith.constant 0 : index
    %c0_19 = arith.constant 0 : index
    %42 = vector.load %arg1[%c8, %c0_18, %c0_19] : memref<9x8x256xf32, #tpu.memory_space<vmem>>, vector<1x8x256xf32>
    %43 = vector.shape_cast %42 : vector<1x8x256xf32> to vector<8x256xf32>
    %44 = arith.mulf %41, %43 : vector<8x256xf32>
    %45 = arith.addf %40, %44 : vector<8x256xf32>
    %c0_20 = arith.constant 0 : index
    %c0_21 = arith.constant 0 : index
    %46 = vector.load %arg2[%c0_20, %c0_21] : memref<8x1xf32, #tpu.memory_space<vmem>>, vector<8x1xf32>
    %47 = vector.broadcast %46 : vector<8x1xf32> to vector<8x256xf32>
    %48 = arith.addf %45, %47 : vector<8x256xf32>
    %cst_22 = arith.constant 0.000000e+00 : f32
    %49 = vector.broadcast %cst_22 : f32 to vector<8x256xf32>
    %50 = arith.maximumf %48, %49 : vector<8x256xf32>
    %c0_23 = arith.constant 0 : index
    %c0_24 = arith.constant 0 : index
    %51 = vector.load %arg3[%c0_23, %c0_24] : memref<16x8xf32, #tpu.memory_space<vmem>>, vector<16x8xf32>
    %cst_25 = arith.constant dense<0.000000e+00> : vector<16x256xf32>
    %52 = tpu.matmul %51, %50, %cst_25 {dimension_numbers = #tpu.dot_dimension_numbers<[1], [0], [0], [1], [0, 0, 1, 1], [], []>} : vector<16x8xf32>, vector<8x256xf32>, vector<16x256xf32> -> vector<16x256xf32>
    %c0_26 = arith.constant 0 : index
    %c0_27 = arith.constant 0 : index
    %53 = vector.load %arg4[%c0_26, %c0_27] : memref<16x1xf32, #tpu.memory_space<vmem>>, vector<16x1xf32>
    %54 = vector.broadcast %53 : vector<16x1xf32> to vector<16x256xf32>
    %55 = arith.addf %52, %54 : vector<16x256xf32>
    %cst_28 = arith.constant 0.000000e+00 : f32
    %56 = vector.broadcast %cst_28 : f32 to vector<16x256xf32>
    %57 = arith.maximumf %55, %56 : vector<16x256xf32>
    %c0_29 = arith.constant 0 : index
    %c0_30 = arith.constant 0 : index
    %58 = vector.load %arg5[%c0_29, %c0_30] : memref<16x256xf32, #tpu.memory_space<vmem>>, vector<16x256xf32>
    tpu.vector_store %arg5[%c0_29, %c0_30], %57 {strides = array<i32>} : memref<16x256xf32, #tpu.memory_space<vmem>>, vector<16x256xf32>,
    return
  }
}

</mosaic_0001>

<llo_original>
// kernel: tpu_custom_call.1
$region0: #{tpu_custom_call.1}
  #allocation0 [shape = 'u32[]', space=smem, size = 0x4, offset = 0x4, fixed_abs, tag = 'smem constant byte address 0x4 - core index']
  #allocation1 [shape = 'u32[144,128]{1,0:T(1,128)}', space=vmem, size = 0x12000, scoped, tag = 'internal scratch']
  %s0 = inlined_call_operand.vmem [shape: f32[8,256], index: 0, kind: input, shape index: {}]
  %s1 = inlined_call_operand.hbm [shape: f32[9,8,256], index: 1, kind: input, shape index: {}]
  %s2 = inlined_call_operand.vmem [shape: f32[8,1], index: 2, kind: input, shape index: {}]
  %s3 = inlined_call_operand.vmem [shape: f32[16,8], index: 3, kind: input, shape index: {}]
  %s4 = inlined_call_operand.vmem [shape: f32[16,1], index: 4, kind: input, shape index: {}]
  %s5 = inlined_call_operand.hbm [shape: f32[16,256], index: 5, kind: output, shape index: {}]
  %s6 = sld [smem:[#allocation0]]
  $region34: #{tpu_custom_call.1} parent=0
    _
  %s8 = ssub.s32 1, %s6
  %s9 = scalar_select 0, %s8, %s6
  $region1: #{tpu_custom_call.1} parent=0
    #allocation2 [shape = 'u8[73728]{0}', space=vmem, size = 0x12000, scoped, tag = 'input window, operand 1, single buffered']
    #allocation3 [shape = 's32[1]{0}', space=sflag, size = 0x4, scoped, tag = 'scoped memory for tpu_custom_call.1']
    #allocation4 [shape = 's32[1]{0}', space=sflag, size = 0x4, scoped, tag = 'scoped memory for tpu_custom_call.1']
    #allocation5 [shape = 'u8[16384]{0}', space=vmem, size = 0x4000, scoped, tag = 'output window, operand 0, single buffered']
    %10 = vsyncpa [#allocation3], 0
    %11 = vsyncpa [#allocation4], 0
    // Predicated region
    $region2: #{tpu_custom_call.1} parent=1 // pred_check
      _
    $region3: #{tpu_custom_call.1} parent=1 // pred_check_branch
      %13 = sbr.rel (0) target = $region5
    $region4: #{tpu_custom_call.1} parent=1 // pred_region
      _
    $region5: #{tpu_custom_call.1} parent=1 // pred_fallthru
      _
    // Predicated region
    $region6: #{tpu_custom_call.1} parent=1 // pred_check
      _
    $region7: #{tpu_custom_call.1} parent=1 // pred_check_branch
      %15 = sbr.rel (0) target = $region9
    $region8: #{tpu_custom_call.1} parent=1 // pred_region
      %s17 = ssub.s32 2304, 2304
      %18 = vsyncadd [#allocation3], %s17
      %s19 = sshll.u32 [#allocation2], 4
      %s20 = int_to_ptr.vmem [resolvable:$true] %s19
      %25 = dma.hbm_to_vmem [thread:$0]  %s1, 2304, %s20, [#allocation3], 256, 256, 16
    $region9: #{tpu_custom_call.1} parent=1 // pred_fallthru
      _
    // Predicated region
    $region10: #{tpu_custom_call.1} parent=1 // pred_check
      _
    $region11: #{tpu_custom_call.1} parent=1 // pred_check_branch
      %27 = sbr.rel (0) target = $region13
    $region12: #{tpu_custom_call.1} parent=1 // pred_region
      _
    $region13: #{tpu_custom_call.1} parent=1 // pred_fallthru
      _
    // Predicated region
    $region14: #{tpu_custom_call.1} parent=1 // pred_check
      _
    $region15: #{tpu_custom_call.1} parent=1 // pred_check_branch
      %29 = sbr.rel (0) target = $region17
    $region16: #{tpu_custom_call.1} parent=1 // pred_region
      _
    $region17: #{tpu_custom_call.1} parent=1 // pred_fallthru
      _
    // Predicated region
    $region18: #{tpu_custom_call.1} parent=1 // pred_check
      _
    $region19: #{tpu_custom_call.1} parent=1 // pred_check_branch
      %31 = sbr.rel (0) target = $region21
    $region20: #{tpu_custom_call.1} parent=1 // pred_region
      _
    $region21: #{tpu_custom_call.1} parent=1 // pred_fallthru
      _
    // Predicated region
    $region22: #{tpu_custom_call.1} parent=1 // pred_check
      _
    $region23: #{tpu_custom_call.1} parent=1 // pred_check_branch
      %33 = sbr.rel (0) target = $region25
    $region24: #{tpu_custom_call.1} parent=1 // pred_region
      %34 = dma.done [#allocation3], 2304
    $region25: #{tpu_custom_call.1} parent=1 // pred_fallthru
      _
    %v35 = vld [vmem:[%s0] sm:$0xff]
    %v36 = vld [vmem:[%s0 + $0x8] sm:$0xff]
    %37 = vrot.lane.b32.xlu0 %v35, 17
    %v38 = vpop.permute.xlu0 %37
    %39 = vrot.lane.b32.xlu0 %v36, 17
    %v40 = vpop.permute.xlu0 %39
    %v41 = vlaneseq
    %v42 = vand.u32 %v41, 127
    %vm43 = vcmp.lt.s32.totalorder %v42, 17
    %v44 = vsel %vm43, %v38, %v40
    %v45 = vsel %vm43, %v40, %v38
    %v46 = vld [vmem:[#allocation2] sm:$0xff]
    %v47 = vld [vmem:[#allocation2 + $0x8] sm:$0xff]
    %v48 = vmul.f32 %v45, %v46
    %v49 = vmul.f32 %v44, %v47
    %v50 = vadd.f32 %v48, 0.0
    %v51 = vadd.f32 %v49, 0.0
    %52 = vrot.lane.b32.xlu0 %v35, 16
    %v53 = vpop.permute.xlu0 %52
    %54 = vrot.lane.b32.xlu0 %v36, 16
    %v55 = vpop.permute.xlu0 %54
    %vm56 = vcmp.lt.s32.totalorder %v42, 16
    %v57 = vsel %vm56, %v53, %v55
    %v58 = vsel %vm56, %v55, %v53
    %s59 = scalar_lea.vmem [#allocation2], 16
    %v60 = vld [vmem:[%s59] sm:$0xff]
    %v61 = vld [vmem:[%s59 + $0x8] sm:$0xff]
    %v62 = vmul.f32 %v58, %v60
    %v63 = vmul.f32 %v57, %v61
    %v64 = vadd.f32 %v50, %v62
    %v65 = vadd.f32 %v51, %v63
    %66 = vrot.lane.b32.xlu0 %v35, 15
    %v67 = vpop.permute.xlu0 %66
    %68 = vrot.lane.b32.xlu0 %v36, 15
    %v69 = vpop.permute.xlu0 %68
    %vm70 = vcmp.lt.s32.totalorder %v42, 15
    %v71 = vsel %vm70, %v67, %v69
    %v72 = vsel %vm70, %v69, %v67
    %s73 = scalar_lea.vmem [#allocation2], 32
    %v74 = vld [vmem:[%s73] sm:$0xff]
    %v75 = vld [vmem:[%s73 + $0x8] sm:$0xff]
    %v76 = vmul.f32 %v72, %v74
    %v77 = vmul.f32 %v71, %v75
    %v78 = vadd.f32 %v64, %v76
    %v79 = vadd.f32 %v65, %v77
    %80 = vrot.lane.b32.xlu0 %v35, 1
    %v81 = vpop.permute.xlu0 %80
    %82 = vrot.lane.b32.xlu0 %v36, 1
    %v83 = vpop.permute.xlu0 %82
    %vm84 = vcmp.lt.s32.totalorder %v42, 1
    %v85 = vsel %vm84, %v81, %v83
    %v86 = vsel %vm84, %v83, %v81
    %s87 = scalar_lea.vmem [#allocation2], 48
    %v88 = vld [vmem:[%s87] sm:$0xff]
    %v89 = vld [vmem:[%s87 + $0x8] sm:$0xff]
    %v90 = vmul.f32 %v86, %v88
    %v91 = vmul.f32 %v85, %v89
    %v92 = vadd.f32 %v78, %v90
    %v93 = vadd.f32 %v79, %v91
    %s94 = scalar_lea.vmem [#allocation2], 64
    %v95 = vld [vmem:[%s94] sm:$0xff]
    %v96 = vld [vmem:[%s94 + $0x8] sm:$0xff]
    %v97 = vmul.f32 %v35, %v95
    %v98 = vmul.f32 %v36, %v96
    %v99 = vadd.f32 %v92, %v97
    %v100 = vadd.f32 %v93, %v98
    %101 = vrot.lane.b32.xlu0 %v35, 127
    %v102 = vpop.permute.xlu0 %101
    %103 = vrot.lane.b32.xlu0 %v36, 127
    %v104 = vpop.permute.xlu0 %103
    %vm105 = vcmp.lt.s32.totalorder %v42, 127
    %v106 = vsel %vm105, %v102, %v104
    %v107 = vsel %vm105, %v104, %v102
    %s108 = scalar_lea.vmem [#allocation2], 80
    %v109 = vld [vmem:[%s108] sm:$0xff]
    %v110 = vld [vmem:[%s108 + $0x8] sm:$0xff]
    %v111 = vmul.f32 %v106, %v109
    %v112 = vmul.f32 %v107, %v110
    %v113 = vadd.f32 %v99, %v111
    %v114 = vadd.f32 %v100, %v112
    %115 = vrot.lane.b32.xlu0 %v35, 113
    %v116 = vpop.permute.xlu0 %115
    %117 = vrot.lane.b32.xlu0 %v36, 113
    %v118 = vpop.permute.xlu0 %117
    %vm119 = vcmp.lt.s32.totalorder %v42, 113
    %v120 = vsel %vm119, %v116, %v118
    %v121 = vsel %vm119, %v118, %v116
    %s122 = scalar_lea.vmem [#allocation2], 96
    %v123 = vld [vmem:[%s122] sm:$0xff]
    %v124 = vld [vmem:[%s122 + $0x8] sm:$0xff]
    %v125 = vmul.f32 %v120, %v123
    %v126 = vmul.f32 %v121, %v124
    %v127 = vadd.f32 %v113, %v125
    %v128 = vadd.f32 %v114, %v126
    %129 = vrot.lane.b32.xlu0 %v35, 112
    %v130 = vpop.permute.xlu0 %129
    %131 = vrot.lane.b32.xlu0 %v36, 112
    %v132 = vpop.permute.xlu0 %131
    %vm133 = vcmp.lt.s32.totalorder %v42, 112
    %v134 = vsel %vm133, %v130, %v132
    %v135 = vsel %vm133, %v132, %v130
    %s136 = scalar_lea.vmem [#allocation2], 112
    %v137 = vld [vmem:[%s136] sm:$0xff]
    %v138 = vld [vmem:[%s136 + $0x8] sm:$0xff]
    %v139 = vmul.f32 %v134, %v137
    %v140 = vmul.f32 %v135, %v138
    %v141 = vadd.f32 %v127, %v139
    %v142 = vadd.f32 %v128, %v140
    %143 = vrot.lane.b32.xlu0 %v35, 111
    %v144 = vpop.permute.xlu0 %143
    %145 = vrot.lane.b32.xlu0 %v36, 111
    %v146 = vpop.permute.xlu0 %145
    %vm147 = vcmp.lt.s32.totalorder %v42, 111
    %v148 = vsel %vm147, %v144, %v146
    %v149 = vsel %vm147, %v146, %v144
    %s150 = scalar_lea.vmem [#allocation2], 128
    %v151 = vld [vmem:[%s150] sm:$0xff]
    %v152 = vld [vmem:[%s150 + $0x8] sm:$0xff]
    %v153 = vmul.f32 %v148, %v151
    %v154 = vmul.f32 %v149, %v152
    %v155 = vadd.f32 %v141, %v153
    %v156 = vadd.f32 %v142, %v154
    %v157 = vld [vmem:[%s2] sm:$0xff]
    %159 = vset.pattern.permute.xlu0 0
    %160 = vperm.xlu0 %159, %v157
    %v161 = vpop.permute.xlu0 %160
    %v163 = vadd.f32 %v155, %v161
    %v164 = vadd.f32 %v156, %v161
    %v165 = vmax.f32 %v163, 0.0
    %v166 = vmax.f32 %v164, 0.0
    %v167 = vld [vmem:[%s3] sm:$0xff]
    %v168 = vld [vmem:[%s3 + $0x8] sm:$0xff]
    %v169 = vld [vmem:[%s4] sm:$0xff]
    %v170 = vld [vmem:[%s4 + $0x8] sm:$0xff]
    %172 = vset.pattern.permute.xlu0 0
    %173 = vperm.xlu0 %172, %v169
    %v174 = vpop.permute.xlu0 %173
    %177 = vset.pattern.permute.xlu0 0
    %178 = vperm.xlu0 %177, %v170
    %v179 = vpop.permute.xlu0 %178
    %vm181 = vcmask 64512
    %v183 = vsel %vm181, %v167, 0
    %v186 = vsel %vm181, %v168, 0
    %188 = vmatprep.subr.mxu0 %v166
    %189 = vmatpush1.msra.mxu0 %v165
    %190 = vmatprep.subr.mxu0 0.0
    %191 = vmatpush1.msra.mxu0 0.0
    %192 = vmatprep.subr.mxu0 0.0
    %193 = vmatpush1.msra.mxu0 0.0
    %194 = vmatprep.subr.mxu0 0.0
    %195 = vmatpush1.msra.mxu0 0.0
    %196 = vmatprep.subr.mxu0 0.0
    %197 = vmatpush1.msra.mxu0 0.0
    %198 = vmatprep.subr.mxu0 0.0
    %199 = vmatpush1.msra.mxu0 0.0
    %200 = vmatprep.subr.mxu0 0.0
    %201 = vmatpush1.msra.mxu0 0.0
    %202 = vmatprep.subr.mxu0 0.0
    %203 = vmatpush1.msra.mxu0 0.0
    %204 = vmatprep.subr.mxu0 0.0
    %205 = vmatpush1.msra.mxu0 0.0
    %206 = vmatprep.subr.mxu0 0.0
    %207 = vmatpush1.msra.mxu0 0.0
    %208 = vmatprep.subr.mxu0 0.0
    %209 = vmatpush1.msra.mxu0 0.0
    %210 = vmatprep.subr.mxu0 0.0
    %211 = vmatpush1.msra.mxu0 0.0
    %212 = vmatprep.subr.mxu0 0.0
    %213 = vmatpush1.msra.mxu0 0.0
    %214 = vmatprep.subr.mxu0 0.0
    %215 = vmatpush1.msra.mxu0 0.0
    %216 = vmatprep.subr.mxu0 0.0
    %217 = vmatpush1.msra.mxu0 0.0
    %218 = vmatprep.subr.mxu0 0.0
    %219 = vmatpush1.msra.mxu0 0.0
    %220 = vmatprep.subr.mxu0 0.0
    %221 = vmatpush1.msra.mxu0 0.0
    %222 = vmatprep.subr.mxu0 0.0
    %223 = vmatpush1.msra.mxu0 0.0
    %224 = vmatprep.subr.mxu0 0.0
    %225 = vmatpush1.msra.mxu0 0.0
    %226 = vmatprep.subr.mxu0 0.0
    %227 = vmatpush1.msra.mxu0 0.0
    %228 = vmatprep.subr.mxu0 0.0
    %229 = vmatpush1.msra.mxu0 0.0
    %230 = vmatprep.subr.mxu0 0.0
    %231 = vmatpush1.msra.mxu0 0.0
    %232 = vmatprep.subr.mxu0 0.0
    %233 = vmatpush1.msra.mxu0 0.0
    %234 = vmatprep.subr.mxu0 0.0
    %235 = vmatpush1.msra.mxu0 0.0
    %236 = vmatprep.subr.mxu0 0.0
    %237 = vmatpush1.msra.mxu0 0.0
    %238 = vmatprep.subr.mxu0 0.0
    %239 = vmatpush1.msra.mxu0 0.0
    %240 = vmatprep.subr.mxu0 0.0
    %241 = vmatpush1.msra.mxu0 0.0
    %242 = vmatprep.subr.mxu0 0.0
    %243 = vmatpush1.msra.mxu0 0.0
    %244 = vmatprep.subr.mxu0 0.0
    %245 = vmatpush1.msra.mxu0 0.0
    %246 = vmatprep.subr.mxu0 0.0
    %247 = vmatpush1.msra.mxu0 0.0
    %248 = vmatprep.subr.mxu0 0.0
    %249 = vmatpush1.msra.mxu0 0.0
    %250 = vmatprep.subr.mxu0 0.0
    %251 = vmatpush1.msra.mxu0 0.0
    %252 = vmatprep.mubr.f32.mxu0 0.0
    %253 = vmatmul.mubr.f32.gmra.mrb[0].mxu0 %v183
    %v254 = vpop.f32.mrb[0].mxu0
    %v255 = vadd.f32 %v174, %v254
    %v256 = vpop.f32.mrb[0].mxu0
    %v257 = vadd.f32 %v174, %v256
    %258 = vmatprep.mubr.f32.mxu0 0.0
    %259 = vmatmul.mubr.f32.gmra.mrb[0].mxu0 %v186
    %v260 = vpop.f32.mrb[0].mxu0
    %v261 = vadd.f32 %v179, %v260
    %v262 = vpop.f32.mrb[0].mxu0
    %v263 = vadd.f32 %v179, %v262
    %264 = vdwg.mxu0
    %v265 = vmax.f32 %v255, 0.0
    %v266 = vmax.f32 %v257, 0.0
    %v267 = vmax.f32 %v261, 0.0
    %v268 = vmax.f32 %v263, 0.0
    %269 = vst [vmem:[#allocation5] sm:$0xff] %v265
    %270 = vst [vmem:[#allocation5 + $0x8] sm:$0xff] %v266
    %271 = vst [vmem:[#allocation5 + $0x10] sm:$0xff] %v267
    %272 = vst [vmem:[#allocation5 + $0x18] sm:$0xff] %v268
    // Predicated region
    $region26: #{tpu_custom_call.1} parent=1 // pred_check
      _
    $region27: #{tpu_custom_call.1} parent=1 // pred_check_branch
      %274 = sbr.rel (0) target = $region29
    $region28: #{tpu_custom_call.1} parent=1 // pred_region
      %s276 = ssub.s32 512, 512
      %277 = vsyncadd [#allocation4], %s276
      %s278 = sshll.u32 [#allocation5], 4
      %s279 = int_to_ptr.vmem [resolvable:$true] %s278
      %284 = dma.vmem_to_hbm [thread:$0]  %s279, 512, %s5, [#allocation4], 256, 256, 16
    $region29: #{tpu_custom_call.1} parent=1 // pred_fallthru
      _
    // Predicated region
    $region30: #{tpu_custom_call.1} parent=1 // pred_check
      _
    $region31: #{tpu_custom_call.1} parent=1 // pred_check_branch
      %286 = sbr.rel (0) target = $region33
    $region32: #{tpu_custom_call.1} parent=1 // pred_region
      %287 = dma.done [#allocation4], 512
    $region33: #{tpu_custom_call.1} parent=1 // pred_fallthru
      _
    %288 = vsyncpa [#allocation3], 1
    %289 = vsyncpa [#allocation4], 1

</llo_original>
